<compile_context>
chip_gen: v5e
topology: v5e:2x2
jax: 0.10.0
libtpu: 0.0.40
codegen_flags: <defaults>
</compile_context>

<pallas_src>
import jax
import jax.numpy as jnp
from jax.experimental import pallas as pl
from jax.experimental.pallas import tpu as pltpu

INPUT_DIM = 63
HIDDEN_DIM_1 = 32
HIDDEN_DIM_2 = 16
OUTPUT_DIM = 1

DEFAULT_BLOCK_B = 1024  # fits 2x-buffered on v5e (16 MiB scoped) .. v7x (32 MiB)


def _round_up(n, m):
    return ((n + m - 1) // m) * m


def _mlp_kernel(x_ref, w1_ref, b1_ref, w2_ref, b2_ref, w3_ref, b3_ref, o_ref):
    # layer 1: Linear + ReLU  (MXU)
    h1 = jnp.dot(x_ref[...], w1_ref[...], preferred_element_type=jnp.float32)
    h1 = jnp.maximum(h1 + b1_ref[...], 0.0)          # (TB, H1) + (1, H1)

    # layer 2: Linear + ReLU  (MXU)
    h2 = jnp.dot(h1, w2_ref[...], preferred_element_type=jnp.float32)
    h2 = jnp.maximum(h2 + b2_ref[...], 0.0)          # (TB, H2) + (1, H2)

    # layer 3: out_dim == 1 -> VPU multiply + lane reduce (skip the N=1 MXU pass)
    # w3_ref holds W3 as a (1, H2) row.
    h3 = jnp.sum(h2 * w3_ref[...], axis=-1, keepdims=True) + b3_ref[...]

    # Numerically stable sigmoid: exp goes to the EUP, select/div to the VPU.
    z = jnp.exp(-jnp.abs(h3))
    sig = jnp.where(h3 >= 0.0, 1.0 / (1.0 + z), z / (1.0 + z))
    o_ref[...] = sig.astype(o_ref.dtype)


def mlp_forward(x, params, *, block_b=DEFAULT_BLOCK_B):
    """x: (B, INPUT_DIM) float32 -> (B, OUTPUT_DIM) float32."""
    w1, b1, w2, b2, w3, b3 = params
    B = x.shape[0]

    # Biases as (1, dim) 2-D blocks; W3 passed as a (1, H2) row for the
    # broadcast-multiply + lane-reduce formulation of layer 3.
    b1 = b1.reshape(1, HIDDEN_DIM_1)
    b2 = b2.reshape(1, HIDDEN_DIM_2)
    w3_row = w3.reshape(HIDDEN_DIM_2, OUTPUT_DIM).T          # (1, H2)
    b3 = b3.reshape(1, OUTPUT_DIM)

    # Batch tile: multiple of 8 (sublane), no larger than the padded batch.
    tb = min(_round_up(block_b, 8), _round_up(B, 8))
    B_pad = _round_up(B, tb)
    if B_pad != B:
        x = jnp.pad(x, ((0, B_pad - B), (0, 0)))

    grid = (B_pad // tb,)

    x_spec = pl.BlockSpec((tb, INPUT_DIM), lambda i: (i, 0))
    out_spec = pl.BlockSpec((tb, OUTPUT_DIM), lambda i: (i, 0))
    # Constant index_map -> weights/biases resident in VMEM for the whole grid.
    const = lambda shape: pl.BlockSpec(shape, lambda i: (0, 0))

    out = pl.pallas_call(
        _mlp_kernel,
        out_shape=jax.ShapeDtypeStruct((B_pad, OUTPUT_DIM), jnp.float32),
        grid=grid,
        in_specs=[
            x_spec,
            const((INPUT_DIM, HIDDEN_DIM_1)),
            const((1, HIDDEN_DIM_1)),
            const((HIDDEN_DIM_1, HIDDEN_DIM_2)),
            const((1, HIDDEN_DIM_2)),
            const((1, HIDDEN_DIM_2)),   # w3 as a row
            const((1, OUTPUT_DIM)),
        ],
        out_specs=out_spec,
        compiler_params=pltpu.CompilerParams(
            dimension_semantics=("parallel",),
        ),
    )(x, w1, b1, w2, b2, w3_row, b3)

    return out[:B]


def init_params(key):
    """Deterministic synthetic init (PyTorch-style uniform fan_in bounds)."""
    ks = jax.random.split(key, 6)

    def uniform(k, shape, fan_in):
        bound = 1.0 / jnp.sqrt(fan_in)
        return jax.random.uniform(k, shape, jnp.float32, -bound, bound)

    # Stored as (in, out) so the kernel computes x @ W + b.
    w1 = uniform(ks[0], (INPUT_DIM, HIDDEN_DIM_1), INPUT_DIM)
    b1 = uniform(ks[1], (HIDDEN_DIM_1,), INPUT_DIM)
    w2 = uniform(ks[2], (HIDDEN_DIM_1, HIDDEN_DIM_2), HIDDEN_DIM_1)
    b2 = uniform(ks[3], (HIDDEN_DIM_2,), HIDDEN_DIM_1)
    w3 = uniform(ks[4], (HIDDEN_DIM_2, OUTPUT_DIM), HIDDEN_DIM_2)
    b3 = uniform(ks[5], (OUTPUT_DIM,), HIDDEN_DIM_2)
    return (w1, b1, w2, b2, w3, b3)


def reference_forward(x, params):
    w1, b1, w2, b2, w3, b3 = params
    h = jax.nn.relu(x @ w1 + b1)
    h = jax.nn.relu(h @ w2 + b2)
    return jax.nn.sigmoid(h @ w3 + b3)


if __name__ == "__main__":
    key = jax.random.PRNGKey(0)
    k_params, k_x1, k_x2 = jax.random.split(key, 3)

    params = init_params(k_params)

    # Small primary case (single tile).
    batch = 8
    x = jax.random.normal(k_x1, (batch, INPUT_DIM), dtype=jnp.float32)
    out = jax.block_until_ready(mlp_forward(x, params))
    ref = reference_forward(x, params)
    assert out.shape == (batch, OUTPUT_DIM)
    assert jnp.allclose(out, ref, atol=1e-5, rtol=1e-5)

    # Exercise the multi-tile + tail-padding path with a small tile size.
    batch2 = 37
    x2 = jax.random.normal(k_x2, (batch2, INPUT_DIM), dtype=jnp.float32)
    out2 = jax.block_until_ready(mlp_forward(x2, params, block_b=16))
    ref2 = reference_forward(x2, params)
    assert out2.shape == (batch2, OUTPUT_DIM)
    assert jnp.allclose(out2, ref2, atol=1e-5, rtol=1e-5)

    print("KERNEL_OK")
</pallas_src>

<mosaic_0001>
module attributes {stable_mosaic.version = 11 : i64} {
  func.func @_mlp_kernel(%arg0: i32, %arg1: memref<8x63xf32, #tpu.memory_space<vmem>>, %arg2: memref<63x32xf32, #tpu.memory_space<vmem>>, %arg3: memref<1x32xf32, #tpu.memory_space<vmem>>, %arg4: memref<32x16xf32, #tpu.memory_space<vmem>>, %arg5: memref<1x16xf32, #tpu.memory_space<vmem>>, %arg6: memref<1x16xf32, #tpu.memory_space<vmem>>, %arg7: memref<1x1xf32, #tpu.memory_space<vmem>>, %arg8: memref<8x1xf32, #tpu.memory_space<vmem>>) attributes {dimension_semantics = [#tpu.dimension_semantics<parallel>], iteration_bounds = array<i64: 1>, scalar_prefetch = 0 : i64, scratch_operands = 0 : i64, tpu.core_type = #tpu.core_type<tc>, window_params = [{transform_indices = @transform_0, window_bounds = array<i64: 8, 63>}, {pipeline_mode = #tpu.pipeline_mode<synchronous>, transform_indices = @transform_1, window_bounds = array<i64: 63, 32>}, {pipeline_mode = #tpu.pipeline_mode<synchronous>, transform_indices = @transform_2, window_bounds = array<i64: 1, 32>}, {pipeline_mode = #tpu.pipeline_mode<synchronous>, transform_indices = @transform_3, window_bounds = array<i64: 32, 16>}, {pipeline_mode = #tpu.pipeline_mode<synchronous>, transform_indices = @transform_4, window_bounds = array<i64: 1, 16>}, {pipeline_mode = #tpu.pipeline_mode<synchronous>, transform_indices = @transform_5, window_bounds = array<i64: 1, 16>}, {pipeline_mode = #tpu.pipeline_mode<synchronous>, transform_indices = @transform_6, window_bounds = array<i64: 1, 1>}, {transform_indices = @transform_7, window_bounds = array<i64: 8, 1>}]} {
    %c0 = arith.constant 0 : index
    %c0_0 = arith.constant 0 : index
    %0 = vector.load %arg1[%c0, %c0_0] : memref<8x63xf32, #tpu.memory_space<vmem>>, vector<8x63xf32>
    %c0_1 = arith.constant 0 : index
    %c0_2 = arith.constant 0 : index
    %1 = vector.load %arg2[%c0_1, %c0_2] : memref<63x32xf32, #tpu.memory_space<vmem>>, vector<63x32xf32>
    %cst = arith.constant dense<0.000000e+00> : vector<8x32xf32>
    %2 = tpu.matmul %0, %1, %cst {dimension_numbers = #tpu.dot_dimension_numbers<[1], [0], [0], [1], [0, 0, 1, 1], [], []>} : vector<8x63xf32>, vector<63x32xf32>, vector<8x32xf32> -> vector<8x32xf32>
    %c0_3 = arith.constant 0 : index
    %c0_4 = arith.constant 0 : index
    %3 = vector.load %arg3[%c0_3, %c0_4] : memref<1x32xf32, #tpu.memory_space<vmem>>, vector<1x32xf32>
    %4 = vector.broadcast %3 : vector<1x32xf32> to vector<8x32xf32>
    %5 = arith.addf %2, %4 : vector<8x32xf32>
    %cst_5 = arith.constant 0.000000e+00 : f32
    %6 = vector.broadcast %cst_5 : f32 to vector<8x32xf32>
    %7 = arith.maximumf %5, %6 : vector<8x32xf32>
    %c0_6 = arith.constant 0 : index
    %c0_7 = arith.constant 0 : index
    %8 = vector.load %arg4[%c0_6, %c0_7] : memref<32x16xf32, #tpu.memory_space<vmem>>, vector<32x16xf32>
    %cst_8 = arith.constant dense<0.000000e+00> : vector<8x16xf32>
    %9 = tpu.matmul %7, %8, %cst_8 {dimension_numbers = #tpu.dot_dimension_numbers<[1], [0], [0], [1], [0, 0, 1, 1], [], []>} : vector<8x32xf32>, vector<32x16xf32>, vector<8x16xf32> -> vector<8x16xf32>
    %c0_9 = arith.constant 0 : index
    %c0_10 = arith.constant 0 : index
    %10 = vector.load %arg5[%c0_9, %c0_10] : memref<1x16xf32, #tpu.memory_space<vmem>>, vector<1x16xf32>
    %11 = vector.broadcast %10 : vector<1x16xf32> to vector<8x16xf32>
    %12 = arith.addf %9, %11 : vector<8x16xf32>
    %cst_11 = arith.constant 0.000000e+00 : f32
    %13 = vector.broadcast %cst_11 : f32 to vector<8x16xf32>
    %14 = arith.maximumf %12, %13 : vector<8x16xf32>
    %c0_12 = arith.constant 0 : index
    %c0_13 = arith.constant 0 : index
    %15 = vector.load %arg6[%c0_12, %c0_13] : memref<1x16xf32, #tpu.memory_space<vmem>>, vector<1x16xf32>
    %16 = vector.broadcast %15 : vector<1x16xf32> to vector<8x16xf32>
    %17 = arith.mulf %14, %16 : vector<8x16xf32>
    %cst_14 = arith.constant dense<0.000000e+00> : vector<8xf32>
    %18 = vector.multi_reduction <add>, %17, %cst_14 [1] : vector<8x16xf32> to vector<8xf32>
    %19 = vector.shape_cast %18 : vector<8xf32> to vector<8x1xf32>
    %c0_15 = arith.constant 0 : index
    %c0_16 = arith.constant 0 : index
    %20 = vector.load %arg7[%c0_15, %c0_16] : memref<1x1xf32, #tpu.memory_space<vmem>>, vector<1x1xf32>
    %21 = vector.broadcast %20 : vector<1x1xf32> to vector<8x1xf32>
    %22 = arith.addf %19, %21 : vector<8x1xf32>
    %23 = math.absf %22 : vector<8x1xf32>
    %cst_17 = arith.constant 0.000000e+00 : f32
    %24 = vector.broadcast %cst_17 : f32 to vector<8x1xf32>
    %25 = arith.subf %24, %23 : vector<8x1xf32>
    %26 = math.exp %25 : vector<8x1xf32>
    %cst_18 = arith.constant 0.000000e+00 : f32
    %27 = vector.broadcast %cst_18 : f32 to vector<8x1xf32>
    %28 = arith.cmpf oge, %22, %27 : vector<8x1xf32>
    %cst_19 = arith.constant 1.000000e+00 : f32
    %29 = vector.broadcast %cst_19 : f32 to vector<8x1xf32>
    %30 = arith.addf %29, %26 : vector<8x1xf32>
    %cst_20 = arith.constant 1.000000e+00 : f32
    %31 = vector.broadcast %cst_20 : f32 to vector<8x1xf32>
    %32 = arith.divf %31, %30 : vector<8x1xf32>
    %cst_21 = arith.constant 1.000000e+00 : f32
    %33 = vector.broadcast %cst_21 : f32 to vector<8x1xf32>
    %34 = arith.addf %33, %26 : vector<8x1xf32>
    %35 = arith.divf %26, %34 : vector<8x1xf32>
    %36 = arith.select %28, %32, %35 : vector<8x1xi1>, vector<8x1xf32>
    %c0_22 = arith.constant 0 : index
    %c0_23 = arith.constant 0 : index
    %37 = vector.load %arg8[%c0_22, %c0_23] : memref<8x1xf32, #tpu.memory_space<vmem>>, vector<8x1xf32>
    tpu.vector_store %arg8[%c0_22, %c0_23], %36 {strides = array<i32>} : memref<8x1xf32, #tpu.memory_space<vmem>>, vector<8x1xf32>,
    return
  }
  func.func @transform_0(%arg0: i32) -> (i32, i32) {
    %c0_i32 = arith.constant 0 : i32
    %c0_i32_0 = arith.constant 0 : i32
    return %arg0, %c0_i32 : i32, i32
  }
  func.func @transform_1(%arg0: i32) -> (i32, i32) {
    %c0_i32 = arith.constant 0 : i32
    %c0_i32_0 = arith.constant 0 : i32
    %c0_i32_1 = arith.constant 0 : i32
    return %c0_i32, %c0_i32_0 : i32, i32
  }
  func.func @transform_2(%arg0: i32) -> (i32, i32) {
    %c0_i32 = arith.constant 0 : i32
    %c0_i32_0 = arith.constant 0 : i32
    %c0_i32_1 = arith.constant 0 : i32
    return %c0_i32, %c0_i32_0 : i32, i32
  }
  func.func @transform_3(%arg0: i32) -> (i32, i32) {
    %c0_i32 = arith.constant 0 : i32
    %c0_i32_0 = arith.constant 0 : i32
    %c0_i32_1 = arith.constant 0 : i32
    return %c0_i32, %c0_i32_0 : i32, i32
  }
  func.func @transform_4(%arg0: i32) -> (i32, i32) {
    %c0_i32 = arith.constant 0 : i32
    %c0_i32_0 = arith.constant 0 : i32
    %c0_i32_1 = arith.constant 0 : i32
    return %c0_i32, %c0_i32_0 : i32, i32
  }
  func.func @transform_5(%arg0: i32) -> (i32, i32) {
    %c0_i32 = arith.constant 0 : i32
    %c0_i32_0 = arith.constant 0 : i32
    %c0_i32_1 = arith.constant 0 : i32
    return %c0_i32, %c0_i32_0 : i32, i32
  }
  func.func @transform_6(%arg0: i32) -> (i32, i32) {
    %c0_i32 = arith.constant 0 : i32
    %c0_i32_0 = arith.constant 0 : i32
    %c0_i32_1 = arith.constant 0 : i32
    return %c0_i32, %c0_i32_0 : i32, i32
  }
  func.func @transform_7(%arg0: i32) -> (i32, i32) {
    %c0_i32 = arith.constant 0 : i32
    %c0_i32_0 = arith.constant 0 : i32
    return %arg0, %c0_i32 : i32, i32
  }
}

</mosaic_0001>

<llo_original>
// kernel: tpu_custom_call.1
$region0: #{tpu_custom_call.1}
  #allocation0 [shape = 'u32[]', space=smem, size = 0x4, offset = 0x4, fixed_abs, tag = 'smem constant byte address 0x4 - core index']
  #allocation1 [shape = 'u32[72,128]{1,0:T(1,128)}', space=vmem, size = 0x9000, scoped, tag = 'internal scratch']
  #allocation2 [shape = 'f32[1,1]{1,0:T(1,128)S(1)}', space=vmem, size = 0x200, scoped, tag = 'scoped memory for tpu_custom_call.1']
  %s0 = inlined_call_operand.vmem [shape: f32[8,63], index: 0, kind: input, shape index: {}]
  %s1 = inlined_call_operand.vmem [shape: f32[63,32], index: 1, kind: input, shape index: {}]
  %s2 = inlined_call_operand.vmem [shape: f32[1,32], index: 2, kind: input, shape index: {}]
  %s3 = inlined_call_operand.vmem [shape: f32[32,16], index: 3, kind: input, shape index: {}]
  %s4 = inlined_call_operand.vmem [shape: f32[1,16], index: 4, kind: input, shape index: {}]
  %s5 = inlined_call_operand.vmem [shape: f32[1,16], index: 5, kind: input, shape index: {}]
  %s6 = inlined_call_operand.<no memory space> [shape: f32[1,1], index: 6, kind: input, shape index: {}]
  %s7 = inlined_call_operand.vmem [shape: f32[8,1], index: 7, kind: output, shape index: {}]
  %s8 = sld [smem:[#allocation0]]
  $region38: #{tpu_custom_call.1} parent=0
    _
  %s10 = ssub.s32 1, %s8
  %s11 = scalar_select 0, %s10, %s8
  %v12 = vstv %s6
  %13 = vst [vmem:[#allocation2] sm:$0x1] %v12
  // Predicated region
  $region2: #{tpu_custom_call.1} parent=0 // pred_check
    _
  $region3: #{tpu_custom_call.1} parent=0 // pred_check_branch
    %15 = sbr.rel (0) target = $region5
  $region4: #{tpu_custom_call.1} parent=0 // pred_region
    _
  $region5: #{tpu_custom_call.1} parent=0 // pred_fallthru
    _
  // Predicated region
  $region6: #{tpu_custom_call.1} parent=0 // pred_check
    _
  $region7: #{tpu_custom_call.1} parent=0 // pred_check_branch
    %17 = sbr.rel (0) target = $region9
  $region8: #{tpu_custom_call.1} parent=0 // pred_region
    _
  $region9: #{tpu_custom_call.1} parent=0 // pred_fallthru
    _
  // Predicated region
  $region10: #{tpu_custom_call.1} parent=0 // pred_check
    _
  $region11: #{tpu_custom_call.1} parent=0 // pred_check_branch
    %19 = sbr.rel (0) target = $region13
  $region12: #{tpu_custom_call.1} parent=0 // pred_region
    _
  $region13: #{tpu_custom_call.1} parent=0 // pred_fallthru
    _
  // Predicated region
  $region14: #{tpu_custom_call.1} parent=0 // pred_check
    _
  $region15: #{tpu_custom_call.1} parent=0 // pred_check_branch
    %21 = sbr.rel (0) target = $region17
  $region16: #{tpu_custom_call.1} parent=0 // pred_region
    _
  $region17: #{tpu_custom_call.1} parent=0 // pred_fallthru
    _
  // Predicated region
  $region18: #{tpu_custom_call.1} parent=0 // pred_check
    _
  $region19: #{tpu_custom_call.1} parent=0 // pred_check_branch
    %23 = sbr.rel (0) target = $region21
  $region20: #{tpu_custom_call.1} parent=0 // pred_region
    _
  $region21: #{tpu_custom_call.1} parent=0 // pred_fallthru
    _
  // Predicated region
  $region22: #{tpu_custom_call.1} parent=0 // pred_check
    _
  $region23: #{tpu_custom_call.1} parent=0 // pred_check_branch
    %25 = sbr.rel (0) target = $region25
  $region24: #{tpu_custom_call.1} parent=0 // pred_region
    _
  $region25: #{tpu_custom_call.1} parent=0 // pred_fallthru
    _
  // Predicated region
  $region26: #{tpu_custom_call.1} parent=0 // pred_check
    _
  $region27: #{tpu_custom_call.1} parent=0 // pred_check_branch
    %27 = sbr.rel (0) target = $region29
  $region28: #{tpu_custom_call.1} parent=0 // pred_region
    _
  $region29: #{tpu_custom_call.1} parent=0 // pred_fallthru
    _
  %v28 = vld [vmem:[%s0] sm:$0xff]
  %v29 = vld [vmem:[%s1] sm:$0xff]
  %v30 = vld [vmem:[%s1 + $0x8] sm:$0xff]
  %v31 = vld [vmem:[%s1 + $0x10] sm:$0xff]
  %v32 = vld [vmem:[%s1 + $0x18] sm:$0xff]
  %v33 = vld [vmem:[%s1 + $0x20] sm:$0xff]
  %v34 = vld [vmem:[%s1 + $0x28] sm:$0xff]
  %v35 = vld [vmem:[%s1 + $0x30] sm:$0xff]
  %v36 = vld [vmem:[%s1 + $0x38] sm:$0x7f]
  %v37 = vld [vmem:[%s2] sm:$0x1]
  %v39 = vperm.slane %v37, 0
  %vm41 = vcmask 515072
  %v43 = vsel %vm41, %v28, 0
  %vm45 = vcmask 1046528
  %v47 = vsel %vm45, %v36, 0
  %49 = vmatpush.msra.mxu0 0.0
  %50 = vmatpush.msra.mxu0 0.0
  %51 = vmatpush.msra.mxu0 0.0
  %52 = vmatpush.msra.mxu0 0.0
  %53 = vmatpush.msra.mxu0 0.0
  %54 = vmatpush.msra.mxu0 0.0
  %55 = vmatpush.msra.mxu0 0.0
  %56 = vmatpush.msra.mxu0 0.0
  %57 = vmatpush.msra.mxu0 %v47
  %58 = vmatpush.msra.mxu0 %v35
  %59 = vmatpush.msra.mxu0 %v34
  %60 = vmatpush.msra.mxu0 %v33
  %61 = vmatpush.msra.mxu0 %v32
  %62 = vmatpush.msra.mxu0 %v31
  %63 = vmatpush.msra.mxu0 %v30
  %64 = vmatpush.msra.mxu0 %v29
  %65 = vmatmul.f32.gmra.mxu0 %v43
  %v66 = vpop.f32.mrf.mxu0
  %v67 = vadd.f32 %v39, %v66
  %68 = vdwg.mxu0
  %v69 = vmax.f32 %v67, 0.0
  %v70 = vld [vmem:[%s3] sm:$0xff]
  %v71 = vld [vmem:[%s3 + $0x8] sm:$0xff]
  %v72 = vld [vmem:[%s3 + $0x10] sm:$0xff]
  %v73 = vld [vmem:[%s3 + $0x18] sm:$0xff]
  %v74 = vld [vmem:[%s4] sm:$0x1]
  %v76 = vperm.slane %v74, 0
  %vm78 = vcmask 261120
  %v80 = vsel %vm78, %v69, 0
  %82 = vmatpush.msra.mxu0 0.0
  %83 = vmatpush.msra.mxu0 0.0
  %84 = vmatpush.msra.mxu0 0.0
  %85 = vmatpush.msra.mxu0 0.0
  %86 = vmatpush.msra.mxu0 0.0
  %87 = vmatpush.msra.mxu0 0.0
  %88 = vmatpush.msra.mxu0 0.0
  %89 = vmatpush.msra.mxu0 0.0
  %90 = vmatpush.msra.mxu0 0.0
  %91 = vmatpush.msra.mxu0 0.0
  %92 = vmatpush.msra.mxu0 0.0
  %93 = vmatpush.msra.mxu0 0.0
  %94 = vmatpush.msra.mxu0 %v73
  %95 = vmatpush.msra.mxu0 %v72
  %96 = vmatpush.msra.mxu0 %v71
  %97 = vmatpush.msra.mxu0 %v70
  %98 = vmatmul.f32.gmra.mxu0 %v80
  %v99 = vpop.f32.mrf.mxu0
  %v100 = vadd.f32 %v76, %v99
  %101 = vdwg.mxu0
  %v102 = vmax.f32 %v100, 0.0
  %v103 = vld [vmem:[%s5] sm:$0x1]
  %v105 = vperm.slane %v103, 0
  %v107 = vmul.f32 %v102, %v105
  %vm108 = vcmask 130048
  %v109 = vsel %vm108, %v107, 0.0
  %110 = vadd.xlane.f32.xlu0 %v109
  %v111 = vpop.xlane.xlu0 %110
  %v112 = vld [vmem:[#allocation2] sm:$0x1]
  %v114 = vperm.slane %v112, 0
  %v116 = vadd.f32 %v111, %v114
  %v117 = vand.u32 2147483647, %v116
  %v118 = vsub.f32 0.0, %v117
  %v119 = vmul.f32 %v118, 1.442695
  %v120 = vpow.pop %v119
  %vm121 = vcmp.ge.f32.partialorder %v116, 0.0
  %v122 = vadd.f32 %v120, 1.0
  %v123 = vrcp.pop %v122
  %v124 = vmul.f32 %v122, %v123
  %v125 = vsub.f32 1.0, %v124
  %v126 = vmul.f32 %v123, %v125
  %v127 = vadd.f32 %v123, %v126
  %vm128 = vweird.f32 %v122
  %vm129 = vweird.f32 %v123
  %vm130 = vmor %vm128, %vm129
  %v131 = vsel %vm130, %v123, %v127
  %v132 = vand.u32 2147483647, %v122
  %vm133 = vcmp.eq.f32.partialorder %v132, 8.507059e+37
  %v134 = vand.u32 %v122, 2147483648
  %v135 = vor.u32 1.1754944e-38, %v134
  %v136 = vsel %vm133, %v135, %v131
  %v137 = vmul.f32 1.0, %v136
  %v138 = vmul.f32 %v120, %v136
  %v139 = vsel %vm121, %v137, %v138
  %vm140 = vcmask 7168
  %141 = vst.msk [vmem:[%s7] sm:$0xff] %vm140, %v139
  // Predicated region
  $region30: #{tpu_custom_call.1} parent=0 // pred_check
    _
  $region31: #{tpu_custom_call.1} parent=0 // pred_check_branch
    %143 = sbr.rel (0) target = $region33
  $region32: #{tpu_custom_call.1} parent=0 // pred_region
    _
  $region33: #{tpu_custom_call.1} parent=0 // pred_fallthru
    _
  // Predicated region
  $region34: #{tpu_custom_call.1} parent=0 // pred_check
    _
  $region35: #{tpu_custom_call.1} parent=0 // pred_check_branch
    %145 = sbr.rel (0) target = $region37
  $region36: #{tpu_custom_call.1} parent=0 // pred_region
    _
  $region37: #{tpu_custom_call.1} parent=0 // pred_fallthru
    _

</llo_original>
